<compile_context>
chip_gen: v7x
topology: tpu7x:2x2x1
jax: 0.10.0
libtpu: 0.0.40
codegen_flags: <defaults>
</compile_context>

<pallas_src>
import functools

import numpy as np
import jax
import jax.numpy as jnp
from jax.experimental import pallas as pl
from jax.experimental.pallas import tpu as pltpu


def _ceil_to(x, m):
    return ((x + m - 1) // m) * m


def _edge_loss_kernel(tgt_ref, rec_ref, loss_ref,
                      edge_acc, row_hit, col_hit, row_sq,
                      *, total_elems):
    # tgt_ref : (tr, tc) tile of adj_tgt            (padded with zeros)
    # rec_ref : (tc, tr) tile of adj_rec[:C, :R]    (natural frame, no transpose)
    # loss_ref: (1, 1)   scalar output (resident across the whole grid)
    # scratch : edge_acc (1,1), row_hit/col_hit/row_sq (1, P) lane-dense, f32
    i = pl.program_id(0)
    j = pl.program_id(1)
    nr = pl.num_programs(0)
    nc = pl.num_programs(1)
    tr = tgt_ref.shape[0]
    tc = tgt_ref.shape[1]

    @pl.when((i == 0) & (j == 0))
    def _init():
        edge_acc[...] = jnp.zeros_like(edge_acc)
        row_hit[...] = jnp.zeros_like(row_hit)
        col_hit[...] = jnp.zeros_like(col_hit)
        row_sq[...] = jnp.zeros_like(row_sq)

    tgt = tgt_ref[...].astype(jnp.float32)        # (tr, tc)
    rec = rec_ref[...].astype(jnp.float32)        # (tc, tr)  == new_adj tile^T
    tgt_t = jnp.transpose(tgt)                    # (tc, tr)  one XLU transpose/tile

    nz = (tgt != 0.0).astype(jnp.float32)         # (tr, tc)
    nz_t = (tgt_t != 0.0).astype(jnp.float32)     # (tc, tr)

    # global nonzero count
    edge_acc[...] += jnp.sum(nz, keepdims=True)   # (1, 1)

    r0 = pl.multiple_of(i * tr, 128)
    c0 = pl.multiple_of(j * tc, 128)

    # col_hit[c] = any row with tgt[:, c] != 0   -> lane-dense (1, tc) update
    col_hit[:, pl.ds(c0, tc)] = jnp.maximum(
        col_hit[:, pl.ds(c0, tc)], jnp.max(nz, axis=0, keepdims=True))
    # row_hit[r] = any col with tgt[r, :] != 0   -> lane-dense (1, tr) update
    row_hit[:, pl.ds(r0, tr)] = jnp.maximum(
        row_hit[:, pl.ds(r0, tr)], jnp.max(nz_t, axis=0, keepdims=True))

    # diff in the transposed frame: diff_t[b, a] = rec[c0+b, r0+a] - tgt[r0+a, c0+b]
    diff = rec - tgt_t                            # (tc, tr)
    row_sq[:, pl.ds(r0, tr)] += jnp.sum(diff * diff, axis=0, keepdims=True)

    @pl.when((i == nr - 1) & (j == nc - 1))
    def _finalize():
        edge_num = edge_acc[...]                                  # (1, 1)
        denom = jnp.maximum(jnp.float32(total_elems) - edge_num,
                            jnp.float32(1.0))                     # Inf guard
        neg_w = edge_num / denom                                  # (1, 1)
        # node i is "hit" if it is the source OR target of any edge
        hit = jnp.maximum(row_hit[...], col_hit[...])             # (1, P)
        w = jnp.where(hit > 0.0, jnp.float32(1.0), neg_w)         # (1, P)
        loss_ref[...] = jnp.sum(w * row_sq[...], keepdims=True)   # (1, 1)


def edge_loss(adj_rec, adj_tgt, *, block_rows=512, block_cols=2048,
              tgt_compute_dtype=None):
    """Pallas implementation of the decoder edge loss (dense adj_tgt path)."""
    R, C = adj_tgt.shape
    # TODO(synk): non-square adj_tgt and the torch.sparse input branch are not
    # supported; the original row-indexing `weight_matrix[indices] = 1.0` only
    # makes sense when all node indices < R anyway.
    assert R == C, "edge-loss kernel assumes a square adjacency target"

    # Layout plumbing only: slice to the target frame (no transpose — the
    # transpose is folded into the kernel's BlockSpec / per-tile XLU).
    rec = adj_rec[:C, :R].astype(jnp.float32)                     # (C, R)
    if tgt_compute_dtype is not None:
        # Optional narrow stream for binary adjacencies (0/1 exact in bf16).
        tgt = adj_tgt.astype(tgt_compute_dtype)
    else:
        tgt = adj_tgt.astype(jnp.float32)

    # Tile sizes: both dims are lane dims of one of the two input tiles, so
    # keep both multiples of 128.
    tr = min(_ceil_to(block_rows, 128), _ceil_to(R, 128))
    tc = min(_ceil_to(block_cols, 128), _ceil_to(C, 128))
    Rp = _ceil_to(R, tr)
    Cp = _ceil_to(C, tc)
    P = max(Rp, Cp)

    # Zero padding is mathematically neutral for this loss (padded rows/cols
    # contribute 0 to edge count, hits and squared error); no-op when shapes
    # already align with the tiles.
    if (tgt.shape[0], tgt.shape[1]) != (Rp, Cp):
        tgt = jnp.pad(tgt, ((0, Rp - R), (0, Cp - C)))
    if (rec.shape[0], rec.shape[1]) != (Cp, Rp):
        rec = jnp.pad(rec, ((0, Cp - C), (0, Rp - R)))

    nr, nc = Rp // tr, Cp // tc

    kernel = functools.partial(_edge_loss_kernel, total_elems=float(R * C))

    loss = pl.pallas_call(
        kernel,
        out_shape=jax.ShapeDtypeStruct((1, 1), jnp.float32),
        grid_spec=pltpu.PrefetchScalarGridSpec(
            num_scalar_prefetch=0,
            grid=(nr, nc),
            in_specs=[
                # target tile (tr, tc) at block (i, j)
                pl.BlockSpec((tr, tc), lambda i, j: (i, j)),
                # reconstruction tile in its natural frame: block (j, i),
                # shape (tc, tr)  == transpose of the new_adj tile
                pl.BlockSpec((tc, tr), lambda i, j: (j, i)),
            ],
            out_specs=pl.BlockSpec((1, 1), lambda i, j: (0, 0)),
            scratch_shapes=[
                pltpu.VMEM((1, 1), jnp.float32),   # edge count
                pltpu.VMEM((1, P), jnp.float32),   # row hit
                pltpu.VMEM((1, P), jnp.float32),   # col hit
                pltpu.VMEM((1, P), jnp.float32),   # per-row squared error
            ],
        ),
        compiler_params=pltpu.CompilerParams(
            # Output + accumulators are resident across both axes -> arbitrary.
            dimension_semantics=("arbitrary", "arbitrary")),
    )(tgt, rec)
    return loss[0, 0]


def edge_loss_reference(adj_rec, adj_tgt):
    """NumPy (float64) reference with the exact PyTorch semantics."""
    rec = np.asarray(adj_rec, dtype=np.float64)
    tgt = np.asarray(adj_tgt, dtype=np.float64)
    R, C = tgt.shape
    indices = np.argwhere(tgt != 0)                 # (E, 2), like .nonzero()
    edge_num = indices.shape[0]
    total_num = R * C
    new_adj = rec[:C, :R].T
    neg_weight = edge_num / (total_num - edge_num)
    weight_matrix = np.full_like(new_adj, neg_weight)
    weight_matrix[indices] = 1.0                    # same row-indexing as torch
    return np.sum(weight_matrix * (new_adj - tgt) ** 2)


if __name__ == "__main__":
    key = jax.random.PRNGKey(0)
    k1, k2, k3, k4 = jax.random.split(key, 4)

    # Case 1: multi-tile grid (3 row tiles x 2 col tiles, with zero padding),
    # adj_rec larger than adj_tgt (the forward slices adj_rec[:C, :R]).
    adj_rec = jax.random.uniform(k1, (320, 320), dtype=jnp.float32)
    adj_tgt = jax.random.bernoulli(k2, 0.2, (300, 300)).astype(jnp.float32)
    run1 = jax.jit(functools.partial(edge_loss, block_rows=128, block_cols=256))
    loss1 = jax.block_until_ready(run1(adj_rec, adj_tgt))
    ref1 = edge_loss_reference(adj_rec, adj_tgt)
    np.testing.assert_allclose(np.asarray(loss1), ref1, rtol=1e-4, atol=1e-3)

    # Case 2: tiny single-tile case (exercises the padding + single-step path).
    adj_rec2 = jax.random.uniform(k3, (20, 20), dtype=jnp.float32)
    adj_tgt2 = jax.random.bernoulli(k4, 0.2, (16, 16)).astype(jnp.float32)
    loss2 = jax.block_until_ready(jax.jit(edge_loss)(adj_rec2, adj_tgt2))
    ref2 = edge_loss_reference(adj_rec2, adj_tgt2)
    np.testing.assert_allclose(np.asarray(loss2), ref2, rtol=1e-4, atol=1e-4)

    print("KERNEL_OK")
</pallas_src>

<mosaic_0001>
module attributes {stable_mosaic.version = 11 : i64} {
  func.func @_edge_loss_kernel(%arg0: i32, %arg1: i32, %arg2: memref<128x256xf32, #tpu.memory_space<vmem>>, %arg3: memref<256x128xf32, #tpu.memory_space<vmem>>, %arg4: memref<1x1xf32, #tpu.memory_space<vmem>>, %arg5: memref<1x1xf32, #tpu.memory_space<vmem>>, %arg6: memref<1x512xf32, #tpu.memory_space<vmem>>, %arg7: memref<1x512xf32, #tpu.memory_space<vmem>>, %arg8: memref<1x512xf32, #tpu.memory_space<vmem>>) attributes {dimension_semantics = [#tpu.dimension_semantics<arbitrary>, #tpu.dimension_semantics<arbitrary>], iteration_bounds = array<i64: 3, 2>, scalar_prefetch = 0 : i64, scratch_operands = 4 : i64, tpu.core_type = #tpu.core_type<tc>, window_params = [{transform_indices = @transform_0, window_bounds = array<i64: 128, 256>}, {transform_indices = @transform_1, window_bounds = array<i64: 256, 128>}, {pipeline_mode = #tpu.pipeline_mode<synchronous>, transform_indices = @transform_2, window_bounds = array<i64: 1, 1>}]} {
    %c0_i32 = arith.constant 0 : i32
    %0 = arith.cmpi eq, %arg0, %c0_i32 : i32
    %c0_i32_0 = arith.constant 0 : i32
    %1 = arith.cmpi eq, %arg1, %c0_i32_0 : i32
    %2 = arith.andi %0, %1 : i1
    %3 = arith.extui %2 : i1 to i32
    %c0_i32_1 = arith.constant 0 : i32
    %4 = arith.cmpi ne, %3, %c0_i32_1 : i32
    scf.if %4 {
      %cst_21 = arith.constant 0.000000e+00 : f32
      %56 = vector.broadcast %cst_21 : f32 to vector<1x1xf32>
      %c0_22 = arith.constant 0 : index
      %c0_23 = arith.constant 0 : index
      %57 = vector.load %arg5[%c0_22, %c0_23] : memref<1x1xf32, #tpu.memory_space<vmem>>, vector<1x1xf32>
      tpu.vector_store %arg5[%c0_22, %c0_23], %56 {strides = array<i32>} : memref<1x1xf32, #tpu.memory_space<vmem>>, vector<1x1xf32>,
      %cst_24 = arith.constant 0.000000e+00 : f32
      %58 = vector.broadcast %cst_24 : f32 to vector<1x512xf32>
      %c0_25 = arith.constant 0 : index
      %c0_26 = arith.constant 0 : index
      %59 = vector.load %arg6[%c0_25, %c0_26] : memref<1x512xf32, #tpu.memory_space<vmem>>, vector<1x512xf32>
      tpu.vector_store %arg6[%c0_25, %c0_26], %58 {strides = array<i32>} : memref<1x512xf32, #tpu.memory_space<vmem>>, vector<1x512xf32>,
      %cst_27 = arith.constant 0.000000e+00 : f32
      %60 = vector.broadcast %cst_27 : f32 to vector<1x512xf32>
      %c0_28 = arith.constant 0 : index
      %c0_29 = arith.constant 0 : index
      %61 = vector.load %arg7[%c0_28, %c0_29] : memref<1x512xf32, #tpu.memory_space<vmem>>, vector<1x512xf32>
      tpu.vector_store %arg7[%c0_28, %c0_29], %60 {strides = array<i32>} : memref<1x512xf32, #tpu.memory_space<vmem>>, vector<1x512xf32>,
      %cst_30 = arith.constant 0.000000e+00 : f32
      %62 = vector.broadcast %cst_30 : f32 to vector<1x512xf32>
      %c0_31 = arith.constant 0 : index
      %c0_32 = arith.constant 0 : index
      %63 = vector.load %arg8[%c0_31, %c0_32] : memref<1x512xf32, #tpu.memory_space<vmem>>, vector<1x512xf32>
      tpu.vector_store %arg8[%c0_31, %c0_32], %62 {strides = array<i32>} : memref<1x512xf32, #tpu.memory_space<vmem>>, vector<1x512xf32>,
    } else {
    }
    %c0 = arith.constant 0 : index
    %c0_2 = arith.constant 0 : index
    %5 = vector.load %arg2[%c0, %c0_2] : memref<128x256xf32, #tpu.memory_space<vmem>>, vector<128x256xf32>
    %c0_3 = arith.constant 0 : index
    %c0_4 = arith.constant 0 : index
    %6 = vector.load %arg3[%c0_3, %c0_4] : memref<256x128xf32, #tpu.memory_space<vmem>>, vector<256x128xf32>
    %7 = tpu.transpose %5, [1, 0] : vector<128x256xf32> -> vector<256x128xf32>
    %cst = arith.constant 0.000000e+00 : f32
    %8 = vector.broadcast %cst : f32 to vector<128x256xf32>
    %9 = arith.cmpf one, %5, %8 : vector<128x256xf32>
    %10 = arith.extui %9 : vector<128x256xi1> to vector<128x256xi32>
    %11 = arith.sitofp %10 : vector<128x256xi32> to vector<128x256xf32>
    %cst_5 = arith.constant 0.000000e+00 : f32
    %12 = vector.broadcast %cst_5 : f32 to vector<256x128xf32>
    %13 = arith.cmpf one, %7, %12 : vector<256x128xf32>
    %14 = arith.extui %13 : vector<256x128xi1> to vector<256x128xi32>
    %15 = arith.sitofp %14 : vector<256x128xi32> to vector<256x128xf32>
    %c0_6 = arith.constant 0 : index
    %c0_7 = arith.constant 0 : index
    %16 = vector.load %arg5[%c0_6, %c0_7] : memref<1x1xf32, #tpu.memory_space<vmem>>, vector<1x1xf32>
    %17 = vector.shape_cast %11 : vector<128x256xf32> to vector<1x128x256xf32>
    %cst_8 = arith.constant dense<0.000000e+00> : vector<1xf32>
    %18 = vector.multi_reduction <add>, %17, %cst_8 [1, 2] : vector<1x128x256xf32> to vector<1xf32>
    %19 = vector.shape_cast %18 : vector<1xf32> to vector<1x1x1xf32>
    %20 = vector.extract %19[0, 0, 0] : f32 from vector<1x1x1xf32>
    %21 = vector.broadcast %20 : f32 to vector<1x1xf32>
    %22 = arith.addf %16, %21 : vector<1x1xf32>
    %c0_9 = arith.constant 0 : index
    %c0_10 = arith.constant 0 : index
    %23 = vector.load %arg5[%c0_9, %c0_10] : memref<1x1xf32, #tpu.memory_space<vmem>>, vector<1x1xf32>
    tpu.vector_store %arg5[%c0_9, %c0_10], %22 {strides = array<i32>} : memref<1x1xf32, #tpu.memory_space<vmem>>, vector<1x1xf32>,
    %c128_i32 = arith.constant 128 : i32
    %24 = arith.muli %arg0, %c128_i32 : i32
    %25 = tpu.assume_multiple %24, 128 : i32
    %c256_i32 = arith.constant 256 : i32
    %26 = arith.muli %arg1, %c256_i32 : i32
    %27 = tpu.assume_multiple %26, 128 : i32
    %c0_11 = arith.constant 0 : index
    %28 = arith.index_cast %27 : i32 to index
    %29 = vector.load %arg7[%c0_11, %28] : memref<1x512xf32, #tpu.memory_space<vmem>>, vector<1x256xf32>
    %cst_12 = arith.constant dense<0xFF800000> : vector<256xf32>
    %30 = vector.multi_reduction <maximumf>, %11, %cst_12 [0] : vector<128x256xf32> to vector<256xf32>
    %31 = vector.shape_cast %30 : vector<256xf32> to vector<1x256xf32>
    %32 = arith.maximumf %29, %31 : vector<1x256xf32>
    %c0_13 = arith.constant 0 : index
    %33 = arith.index_cast %27 : i32 to index
    %34 = vector.load %arg7[%c0_13, %33] : memref<1x512xf32, #tpu.memory_space<vmem>>, vector<1x256xf32>
    tpu.vector_store %arg7[%c0_13, %33], %32 {strides = array<i32>} : memref<1x512xf32, #tpu.memory_space<vmem>>, vector<1x256xf32>,
    %c0_14 = arith.constant 0 : index
    %35 = arith.index_cast %25 : i32 to index
    %36 = vector.load %arg6[%c0_14, %35] : memref<1x512xf32, #tpu.memory_space<vmem>>, vector<1x128xf32>
    %cst_15 = arith.constant dense<0xFF800000> : vector<128xf32>
    %37 = vector.multi_reduction <maximumf>, %15, %cst_15 [0] : vector<256x128xf32> to vector<128xf32>
    %38 = vector.shape_cast %37 : vector<128xf32> to vector<1x128xf32>
    %39 = arith.maximumf %36, %38 : vector<1x128xf32>
    %c0_16 = arith.constant 0 : index
    %40 = arith.index_cast %25 : i32 to index
    %41 = vector.load %arg6[%c0_16, %40] : memref<1x512xf32, #tpu.memory_space<vmem>>, vector<1x128xf32>
    tpu.vector_store %arg6[%c0_16, %40], %39 {strides = array<i32>} : memref<1x512xf32, #tpu.memory_space<vmem>>, vector<1x128xf32>,
    %42 = arith.subf %6, %7 : vector<256x128xf32>
    %c0_17 = arith.constant 0 : index
    %43 = arith.index_cast %25 : i32 to index
    %44 = vector.load %arg8[%c0_17, %43] : memref<1x512xf32, #tpu.memory_space<vmem>>, vector<1x128xf32>
    %45 = arith.mulf %42, %42 : vector<256x128xf32>
    %cst_18 = arith.constant dense<0.000000e+00> : vector<128xf32>
    %46 = vector.multi_reduction <add>, %45, %cst_18 [0] : vector<256x128xf32> to vector<128xf32>
    %47 = vector.shape_cast %46 : vector<128xf32> to vector<1x128xf32>
    %48 = arith.addf %44, %47 : vector<1x128xf32>
    %c0_19 = arith.constant 0 : index
    %49 = arith.index_cast %25 : i32 to index
    %50 = vector.load %arg8[%c0_19, %49] : memref<1x512xf32, #tpu.memory_space<vmem>>, vector<1x128xf32>
    tpu.vector_store %arg8[%c0_19, %49], %48 {strides = array<i32>} : memref<1x512xf32, #tpu.memory_space<vmem>>, vector<1x128xf32>,
    %c2_i32 = arith.constant 2 : i32
    %51 = arith.cmpi eq, %arg0, %c2_i32 : i32
    %c1_i32 = arith.constant 1 : i32
    %52 = arith.cmpi eq, %arg1, %c1_i32 : i32
    %53 = arith.andi %51, %52 : i1
    %54 = arith.extui %53 : i1 to i32
    %c0_i32_20 = arith.constant 0 : i32
    %55 = arith.cmpi ne, %54, %c0_i32_20 : i32
    scf.if %55 {
      %c0_21 = arith.constant 0 : index
      %c0_22 = arith.constant 0 : index
      %56 = vector.load %arg5[%c0_21, %c0_22] : memref<1x1xf32, #tpu.memory_space<vmem>>, vector<1x1xf32>
      %cst_23 = arith.constant 9.000000e+04 : f32
      %57 = vector.broadcast %cst_23 : f32 to vector<1x1xf32>
      %58 = arith.subf %57, %56 : vector<1x1xf32>
      %cst_24 = arith.constant 1.000000e+00 : f32
      %59 = vector.broadcast %cst_24 : f32 to vector<1x1xf32>
      %60 = arith.maximumf %58, %59 : vector<1x1xf32>
      %61 = arith.divf %56, %60 : vector<1x1xf32>
      %c0_25 = arith.constant 0 : index
      %c0_26 = arith.constant 0 : index
      %62 = vector.load %arg6[%c0_25, %c0_26] : memref<1x512xf32, #tpu.memory_space<vmem>>, vector<1x512xf32>
      %c0_27 = arith.constant 0 : index
      %c0_28 = arith.constant 0 : index
      %63 = vector.load %arg7[%c0_27, %c0_28] : memref<1x512xf32, #tpu.memory_space<vmem>>, vector<1x512xf32>
      %64 = arith.maximumf %62, %63 : vector<1x512xf32>
      %cst_29 = arith.constant 0.000000e+00 : f32
      %65 = vector.broadcast %cst_29 : f32 to vector<1x512xf32>
      %66 = arith.cmpf ogt, %64, %65 : vector<1x512xf32>
      %cst_30 = arith.constant 1.000000e+00 : f32
      %67 = vector.broadcast %cst_30 : f32 to vector<1x512xf32>
      %68 = vector.shape_cast %61 : vector<1x1xf32> to vector<1x1xf32>
      %69 = vector.broadcast %68 : vector<1x1xf32> to vector<1x512xf32>
      %70 = arith.select %66, %67, %69 : vector<1x512xi1>, vector<1x512xf32>
      %c0_31 = arith.constant 0 : index
      %c0_32 = arith.constant 0 : index
      %71 = vector.load %arg8[%c0_31, %c0_32] : memref<1x512xf32, #tpu.memory_space<vmem>>, vector<1x512xf32>
      %72 = arith.mulf %70, %71 : vector<1x512xf32>
      %73 = vector.shape_cast %72 : vector<1x512xf32> to vector<1x1x512xf32>
      %cst_33 = arith.constant dense<0.000000e+00> : vector<1xf32>
      %74 = vector.multi_reduction <add>, %73, %cst_33 [1, 2] : vector<1x1x512xf32> to vector<1xf32>
      %75 = vector.shape_cast %74 : vector<1xf32> to vector<1x1x1xf32>
      %76 = vector.extract %75[0, 0, 0] : f32 from vector<1x1x1xf32>
      %77 = vector.broadcast %76 : f32 to vector<1x1xf32>
      %c0_34 = arith.constant 0 : index
      %c0_35 = arith.constant 0 : index
      %78 = vector.load %arg4[%c0_34, %c0_35] : memref<1x1xf32, #tpu.memory_space<vmem>>, vector<1x1xf32>
      tpu.vector_store %arg4[%c0_34, %c0_35], %77 {strides = array<i32>} : memref<1x1xf32, #tpu.memory_space<vmem>>, vector<1x1xf32>,
    } else {
    }
    return
  }
  func.func @transform_0(%arg0: i32, %arg1: i32) -> (i32, i32) {
    %c0_i32 = arith.constant 0 : i32
    return %arg0, %arg1 : i32, i32
  }
  func.func @transform_1(%arg0: i32, %arg1: i32) -> (i32, i32) {
    %c0_i32 = arith.constant 0 : i32
    return %arg1, %arg0 : i32, i32
  }
  func.func @transform_2(%arg0: i32, %arg1: i32) -> (i32, i32) {
    %c0_i32 = arith.constant 0 : i32
    %c0_i32_0 = arith.constant 0 : i32
    %c0_i32_1 = arith.constant 0 : i32
    return %c0_i32, %c0_i32_0 : i32, i32
  }
}

</mosaic_0001>

<llo_original>
// kernel: edge_loss.1
$region0: #{edge_loss.1}
  #allocation0 [shape = 'u32[]', space=smem, size = 0x4, offset = 0x4, fixed_abs, tag = 'smem constant byte address 0x4 - core index']
  #allocation1 [shape = 'u32[144,128]{1,0:T(1,128)}', space=vmem, size = 0x12000, scoped, tag = 'internal scratch']
  #allocation2 [shape = 'f32[1,1]{1,0:T(1,128)}', space=vmem, size = 0x200, scoped, tag = 'scratch operand']
  #allocation3 [shape = 'f32[1,512]{1,0:T(1,128)}', space=vmem, size = 0x800, scoped, tag = 'scratch operand']
  #allocation4 [shape = 'f32[1,512]{1,0:T(1,128)}', space=vmem, size = 0x800, scoped, tag = 'scratch operand']
  #allocation5 [shape = 'f32[1,512]{1,0:T(1,128)}', space=vmem, size = 0x800, scoped, tag = 'scratch operand']
  %s0 = inlined_call_operand.vmem [shape: f32[384,512], index: 0, kind: input, shape index: {}]
  %s1 = inlined_call_operand.vmem [shape: f32[512,384], index: 1, kind: input, shape index: {}]
  %s2 = inlined_call_operand.hbm [shape: f32[1,1], index: 2, kind: output, shape index: {}]
  %s3 = sld [smem:[#allocation0]]
  $region110: #{edge_loss.1} parent=0
    _
  %s5 = ssub.s32 1, %s3
  %s6 = scalar_select 0, %s5, %s3
  $region1: #{edge_loss.1} parent=0
    #allocation6 [shape = 'u8[262144]{0}', space=vmem, size = 0x40000, scoped, tag = 'input window, operand 0']
    #allocation7 [shape = 'u8[262144]{0}', space=vmem, size = 0x40000, scoped, tag = 'input window, operand 1']
    #allocation8 [shape = 'u8[512]{0}', space=vmem, size = 0x400, scoped, tag = 'output window, operand 0, single buffered']
    #allocation9 [shape = 's32[2]{0}', space=sflag, size = 0x8, scoped, tag = 'scoped memory for edge_loss.1']
    %7 = vsyncpa [#allocation9], 0
    loop: start=0, step=1, limit=8
    $region2: #{edge_loss.1} parent=1 // loop_pre_header
      _
    $region3: #{edge_loss.1} parent=1 // loop_header
      %s9 = sphi 0, %s13
      %p10 = scmp.ge.s32.totalorder %s9, 8
      %s16 = sphi 0, %s28
      %s17 = sphi 0, %s24
      %s18 = sphi 0, %s16
      %s19 = sphi 0, %s17
      %s20 = sphi 0, %s18
      %s21 = sphi 0, %s19
      %s33 = sphi 0, %s35
      %s36 = sphi 0, %s33
      %s37 = sphi 0, %s36
      %s53 = sphi 0, %s37
      %s61 = sphi 0, %s63
      %s64 = sphi 0, %s61
      %s65 = sphi 0, %s64
      %s81 = sphi 0, %s65
      %s85 = sphi 0, %s85
      %s87 = sphi 0, %s85
      %s88 = sphi 0, %s87
      %s102 = sphi 0, %s88
    $region4: #{edge_loss.1} parent=1 // loop_header_branch
      %12 = sbr.rel (%p10) target = $region8
    $region5: #{edge_loss.1} parent=1 // loop_body
      %s14 = ssub.s32 %s9, 1
      %s15 = ssub.s32 %s9, 2
      %s22 = sadd.s32 1, %s17
      %p23 = scmp.ge.s32.totalorder %s22, 2
      %s24 = scalar_select %p23, 0, %s22
      %s25 = sadd.s32 1, %s16
      %s26 = scalar_select %p23, %s25, %s16
      %p27 = scmp.ge.s32.totalorder %s26, 3
      %s28 = scalar_select %p27, 0, %s26
      %s29 = ssub.s32 %s16, %s28
      %s30 = ssub.s32 %s17, %s24
      %s31 = sor.u32 %s29, %s30
      %p32 = scmp.eq.s32.totalorder %s31, 0
      %s34 = sadd.s32 %s33, 1
      %s35 = scalar_select %p32, %s33, %s34
      %p38 = pneg %p32
      %p39 = scmp.eq.s32.totalorder %s9, 5
      %p40 = por %p38, %p39
      %p41 = scmp.ne.s32.totalorder %s33, %s36
      %p42 = scmp.eq.s32.totalorder %s9, 0
      %p43 = por %p41, %p42
      %p44 = scmp.ne.s32.totalorder %s33, %s36
      %p45 = scmp.eq.s32.totalorder %s14, 5
      %p46 = por %p44, %p45
      %p47 = scmp.ne.s32.totalorder %s36, %s37
      %p48 = scmp.eq.s32.totalorder %s14, 0
      %p49 = por %p47, %p48
      %p50 = scmp.ne.s32.totalorder %s36, %s37
      %p51 = scmp.eq.s32.totalorder %s15, 5
      %p52 = por %p50, %p51
      %p54 = scmp.ne.s32.totalorder %s37, %s53
      %p55 = scmp.eq.s32.totalorder %s15, 0
      %p56 = por %p54, %p55
      %s57 = ssub.s32 %s17, %s24
      %s58 = ssub.s32 %s16, %s28
      %s59 = sor.u32 %s57, %s58
      %p60 = scmp.eq.s32.totalorder %s59, 0
      %s62 = sadd.s32 %s61, 1
      %s63 = scalar_select %p60, %s61, %s62
      %p66 = pneg %p60
      %p67 = scmp.eq.s32.totalorder %s9, 5
      %p68 = por %p66, %p67
      %p69 = scmp.ne.s32.totalorder %s61, %s64
      %p70 = scmp.eq.s32.totalorder %s9, 0
      %p71 = por %p69, %p70
      %p72 = scmp.ne.s32.totalorder %s61, %s64
      %p73 = scmp.eq.s32.totalorder %s14, 5
      %p74 = por %p72, %p73
      %p75 = scmp.ne.s32.totalorder %s64, %s65
      %p76 = scmp.eq.s32.totalorder %s14, 0
      %p77 = por %p75, %p76
      %p78 = scmp.ne.s32.totalorder %s64, %s65
      %p79 = scmp.eq.s32.totalorder %s15, 5
      %p80 = por %p78, %p79
      %p82 = scmp.ne.s32.totalorder %s65, %s81
      %p83 = scmp.eq.s32.totalorder %s15, 0
      %p84 = por %p82, %p83
      %s86 = sadd.s32 %s85, 1
      %p89 = scmp.eq.s32.totalorder %s9, 5
      %p90 = scmp.ne.s32.totalorder %s85, %s87
      %p91 = scmp.eq.s32.totalorder %s9, 0
      %p92 = por %p90, %p91
      %p93 = scmp.ne.s32.totalorder %s85, %s87
      %p94 = scmp.eq.s32.totalorder %s14, 5
      %p95 = por %p93, %p94
      %p96 = scmp.ne.s32.totalorder %s87, %s88
      %p97 = scmp.eq.s32.totalorder %s14, 0
      %p98 = por %p96, %p97
      %p99 = scmp.ne.s32.totalorder %s87, %s88
      %p100 = scmp.eq.s32.totalorder %s15, 5
      %p101 = por %p99, %p100
      %p103 = scmp.ne.s32.totalorder %s88, %s102
      %p104 = scmp.eq.s32.totalorder %s15, 0
      %p105 = por %p103, %p104
      %p106 = scmp.le.s32.totalorder 1, %s9
      %p107 = scmp.lt.s32.totalorder %s9, 7
      %p108 = pnand %p106, %p107
      %p109 = pneg %p108
      // Predicated region
      $region9: #{edge_loss.1} parent=5 // pred_check
        _
      $region10: #{edge_loss.1} parent=5 // pred_check_branch
        %111 = sbr.rel (%p108) target = $region12
      $region11: #{edge_loss.1} parent=5 // pred_region
        %s112 = ssub.s32 %s9, 1
      $region12: #{edge_loss.1} parent=5 // pred_fallthru
        _
      %p113 = scmp.lt.s32.totalorder %s9, 6
      // Predicated region
      $region13: #{edge_loss.1} parent=5 // pred_check
        %p114 = pneg %p113
      $region14: #{edge_loss.1} parent=5 // pred_check_branch
        %116 = sbr.rel (%p114) target = $region16
      $region15: #{edge_loss.1} parent=5 // pred_region
        // Predicated region
        $region17: #{edge_loss.1} parent=15 // pred_check
          %p117 = pneg %p43
        $region18: #{edge_loss.1} parent=15 // pred_check_branch
          %119 = sbr.rel (%p117) target = $region20
        $region19: #{edge_loss.1} parent=15 // pred_region
          %s120 = sand.u32 %s33, 1
          %s121 = sand.u32 %s33, 1
          %s122 = smul.addr %s121, 256
          %s123 = scalar_lea.vmem [#allocation6], %s122
          %s124 = smul.u32 16, %s16
          %s125 = smul.u32 2, %s17
          %s126 = smul.addr %s124, 4
          %s127 = sadd.s32 %s125, %s126
          %s128 = smul.addr %s127, 8
          %s129 = scalar_lea.vmem %s0, %s128
          // Predicated region
          $region21: #{edge_loss.1} parent=19 // pred_check
            _
          $region22: #{edge_loss.1} parent=19 // pred_check_branch
            %131 = sbr.rel (0) target = $region24
          $region23: #{edge_loss.1} parent=19 // pred_region
            // Predicated region
            $region25: #{edge_loss.1} parent=23 // pred_check
              _
            $region26: #{edge_loss.1} parent=23 // pred_check_branch
              %133 = sbr.rel (0) target = $region28
            $region27: #{edge_loss.1} parent=23 // pred_region
              loop: start=0, step=1, limit=1
              $region29: #{edge_loss.1} parent=27 // loop_pre_header
                _
              $region30: #{edge_loss.1} parent=27 // loop_header
                %s135 = sphi 0, %s139
                %p136 = scmp.ge.s32.totalorder %s135, 1
                %s140 = sphi %s129, %s129
                %s141 = sphi %s123, %s123
              $region31: #{edge_loss.1} parent=27 // loop_header_branch
                %138 = sbr.rel (%p136) target = $region35
              $region32: #{edge_loss.1} parent=27 // loop_body
                %v142 = vld [vmem:[%s140] sm:$0xff]
                %143 = vst [vmem:[%s141] sm:$0xff] %v142
                %v144 = vld [vmem:[%s140 + $0x8] sm:$0xff]
                %145 = vst [vmem:[%s141 + $0x8] sm:$0xff] %v144
                %v146 = vld [vmem:[%s140 + $0x20] sm:$0xff]
                %147 = vst [vmem:[%s141 + $0x10] sm:$0xff] %v146
                %v148 = vld [vmem:[%s140 + $0x28] sm:$0xff]
                %149 = vst [vmem:[%s141 + $0x18] sm:$0xff] %v148
                %v150 = vld [vmem:[%s140 + $0x40] sm:$0xff]
                %151 = vst [vmem:[%s141 + $0x20] sm:$0xff] %v150
                %v152 = vld [vmem:[%s140 + $0x48] sm:$0xff]
                %153 = vst [vmem:[%s141 + $0x28] sm:$0xff] %v152
                %v154 = vld [vmem:[%s140 + $0x60] sm:$0xff]
                %155 = vst [vmem:[%s141 + $0x30] sm:$0xff] %v154
                %v156 = vld [vmem:[%s140 + $0x68] sm:$0xff]
                %157 = vst [vmem:[%s141 + $0x38] sm:$0xff] %v156
                %v158 = vld [vmem:[%s140 + $0x80] sm:$0xff]
                %159 = vst [vmem:[%s141 + $0x40] sm:$0xff] %v158
                %v160 = vld [vmem:[%s140 + $0x88] sm:$0xff]
                %161 = vst [vmem:[%s141 + $0x48] sm:$0xff] %v160
                %v162 = vld [vmem:[%s140 + $0xa0] sm:$0xff]
                %163 = vst [vmem:[%s141 + $0x50] sm:$0xff] %v162
                %v164 = vld [vmem:[%s140 + $0xa8] sm:$0xff]
                %165 = vst [vmem:[%s141 + $0x58] sm:$0xff] %v164
                %v166 = vld [vmem:[%s140 + $0xc0] sm:$0xff]
                %167 = vst [vmem:[%s141 + $0x60] sm:$0xff] %v166
                %v168 = vld [vmem:[%s140 + $0xc8] sm:$0xff]
                %169 = vst [vmem:[%s141 + $0x68] sm:$0xff] %v168
                %v170 = vld [vmem:[%s140 + $0xe0] sm:$0xff]
                %171 = vst [vmem:[%s141 + $0x70] sm:$0xff] %v170
                %v172 = vld [vmem:[%s140 + $0xe8] sm:$0xff]
                %173 = vst [vmem:[%s141 + $0x78] sm:$0xff] %v172
                %v174 = vld [vmem:[%s140 + $0x100] sm:$0xff]
                %175 = vst [vmem:[%s141 + $0x80] sm:$0xff] %v174
                %v176 = vld [vmem:[%s140 + $0x108] sm:$0xff]
                %177 = vst [vmem:[%s141 + $0x88] sm:$0xff] %v176
                %v178 = vld [vmem:[%s140 + $0x120] sm:$0xff]
                %179 = vst [vmem:[%s141 + $0x90] sm:$0xff] %v178
                %v180 = vld [vmem:[%s140 + $0x128] sm:$0xff]
                %181 = vst [vmem:[%s141 + $0x98] sm:$0xff] %v180
                %v182 = vld [vmem:[%s140 + $0x140] sm:$0xff]
                %183 = vst [vmem:[%s141 + $0xa0] sm:$0xff] %v182
                %v184 = vld [vmem:[%s140 + $0x148] sm:$0xff]
                %185 = vst [vmem:[%s141 + $0xa8] sm:$0xff] %v184
                %v186 = vld [vmem:[%s140 + $0x160] sm:$0xff]
                %187 = vst [vmem:[%s141 + $0xb0] sm:$0xff] %v186
                %v188 = vld [vmem:[%s140 + $0x168] sm:$0xff]
                %189 = vst [vmem:[%s141 + $0xb8] sm:$0xff] %v188
                %v190 = vld [vmem:[%s140 + $0x180] sm:$0xff]
                %191 = vst [vmem:[%s141 + $0xc0] sm:$0xff] %v190
                %v192 = vld [vmem:[%s140 + $0x188] sm:$0xff]
                %193 = vst [vmem:[%s141 + $0xc8] sm:$0xff] %v192
                %v194 = vld [vmem:[%s140 + $0x1a0] sm:$0xff]
                %195 = vst [vmem:[%s141 + $0xd0] sm:$0xff] %v194
                %v196 = vld [vmem:[%s140 + $0x1a8] sm:$0xff]
                %197 = vst [vmem:[%s141 + $0xd8] sm:$0xff] %v196
                %v198 = vld [vmem:[%s140 + $0x1c0] sm:$0xff]
                %199 = vst [vmem:[%s141 + $0xe0] sm:$0xff] %v198
                %v200 = vld [vmem:[%s140 + $0x1c8] sm:$0xff]
                %201 = vst [vmem:[%s141 + $0xe8] sm:$0xff] %v200
                %v202 = vld [vmem:[%s140 + $0x1e0] sm:$0xff]
                %203 = vst [vmem:[%s141 + $0xf0] sm:$0xff] %v202
                %v204 = vld [vmem:[%s140 + $0x1e8] sm:$0xff]
                %205 = vst [vmem:[%s141 + $0xf8] sm:$0xff] %v204
              $region33: #{edge_loss.1} parent=27 // loop_footer
                %s139 = sadd.s32 1, %s135
              $region34: #{edge_loss.1} parent=27 // loop_footer_branch
                %134 = sbr.rel target = $region30
              $region35: #{edge_loss.1} parent=27 // loop_exit
                _
            $region28: #{edge_loss.1} parent=23 // pred_fallthru
              _
            // Predicated region
            $region36: #{edge_loss.1} parent=23 // pred_check
              _
            $region37: #{edge_loss.1} parent=23 // pred_check_branch
              %207 = sbr.rel target = $region39
            $region38: #{edge_loss.1} parent=23 // pred_region
              _
            $region39: #{edge_loss.1} parent=23 // pred_fallthru
              _
          $region24: #{edge_loss.1} parent=19 // pred_fallthru
            _
          %208 = vnop
        $region20: #{edge_loss.1} parent=15 // pred_fallthru
          _
        // Predicated region
        $region40: #{edge_loss.1} parent=15 // pred_check
          %p209 = pneg %p71
        $region41: #{edge_loss.1} parent=15 // pred_check_branch
          %211 = sbr.rel (%p209) target = $region43
        $region42: #{edge_loss.1} parent=15 // pred_region
          %s212 = sand.u32 %s61, 1
          %s213 = sand.u32 %s61, 1
          %s214 = smul.addr %s213, 256
          %s215 = scalar_lea.vmem [#allocation7], %s214
          %s216 = smul.u32 32, %s17
          %s217 = smul.addr %s216, 3
          %s218 = sadd.s32 %s16, %s217
          %s219 = smul.addr %s218, 8
          %s220 = scalar_lea.vmem %s1, %s219
          // Predicated region
          $region44: #{edge_loss.1} parent=42 // pred_check
            _
          $region45: #{edge_loss.1} parent=42 // pred_check_branch
            %222 = sbr.rel (0) target = $region47
          $region46: #{edge_loss.1} parent=42 // pred_region
            // Predicated region
            $region48: #{edge_loss.1} parent=46 // pred_check
              _
            $region49: #{edge_loss.1} parent=46 // pred_check_branch
              %224 = sbr.rel (0) target = $region51
            $region50: #{edge_loss.1} parent=46 // pred_region
              // Predicated region
              $region63: #{edge_loss.1} parent=50 // pred_check
                _
              $region64: #{edge_loss.1} parent=50 // pred_check_branch
                %301 = sbr.rel (0) target = $region66
              $region65: #{edge_loss.1} parent=50 // pred_region
                loop: start=0, step=1, limit=1
                $region67: #{edge_loss.1} parent=65 // loop_pre_header
                  _
                $region68: #{edge_loss.1} parent=65 // loop_header
                  %s303 = sphi 0, %s307
                  %p304 = scmp.ge.s32.totalorder %s303, 1
                  %s308 = sphi %s220, %s220
                  %s309 = sphi %s215, %s215
                $region69: #{edge_loss.1} parent=65 // loop_header_branch
                  %306 = sbr.rel (%p304) target = $region73
                $region70: #{edge_loss.1} parent=65 // loop_body
                  %v310 = vld [vmem:[%s308] sm:$0xff]
                  %311 = vst [vmem:[%s309] sm:$0xff] %v310
                  %v312 = vld [vmem:[%s308 + $0x18] sm:$0xff]
                  %313 = vst [vmem:[%s309 + $0x8] sm:$0xff] %v312
                  %v314 = vld [vmem:[%s308 + $0x30] sm:$0xff]
                  %315 = vst [vmem:[%s309 + $0x10] sm:$0xff] %v314
                  %v316 = vld [vmem:[%s308 + $0x48] sm:$0xff]
                  %317 = vst [vmem:[%s309 + $0x18] sm:$0xff] %v316
                  %v318 = vld [vmem:[%s308 + $0x60] sm:$0xff]
                  %319 = vst [vmem:[%s309 + $0x20] sm:$0xff] %v318
                  %v320 = vld [vmem:[%s308 + $0x78] sm:$0xff]
                  %321 = vst [vmem:[%s309 + $0x28] sm:$0xff] %v320
                  %v322 = vld [vmem:[%s308 + $0x90] sm:$0xff]
                  %323 = vst [vmem:[%s309 + $0x30] sm:$0xff] %v322
                  %v324 = vld [vmem:[%s308 + $0xa8] sm:$0xff]
                  %325 = vst [vmem:[%s309 + $0x38] sm:$0xff] %v324
                  %v326 = vld [vmem:[%s308 + $0xc0] sm:$0xff]
                  %327 = vst [vmem:[%s309 + $0x40] sm:$0xff] %v326
                  %v328 = vld [vmem:[%s308 + $0xd8] sm:$0xff]
                  %329 = vst [vmem:[%s309 + $0x48] sm:$0xff] %v328
                  %v330 = vld [vmem:[%s308 + $0xf0] sm:$0xff]
                  %331 = vst [vmem:[%s309 + $0x50] sm:$0xff] %v330
                  %v332 = vld [vmem:[%s308 + $0x108] sm:$0xff]
                  %333 = vst [vmem:[%s309 + $0x58] sm:$0xff] %v332
                  %v334 = vld [vmem:[%s308 + $0x120] sm:$0xff]
                  %335 = vst [vmem:[%s309 + $0x60] sm:$0xff] %v334
                  %v336 = vld [vmem:[%s308 + $0x138] sm:$0xff]
                  %337 = vst [vmem:[%s309 + $0x68] sm:$0xff] %v336
                  %v338 = vld [vmem:[%s308 + $0x150] sm:$0xff]
                  %339 = vst [vmem:[%s309 + $0x70] sm:$0xff] %v338
                  %v340 = vld [vmem:[%s308 + $0x168] sm:$0xff]
                  %341 = vst [vmem:[%s309 + $0x78] sm:$0xff] %v340
                  %v342 = vld [vmem:[%s308 + $0x180] sm:$0xff]
                  %343 = vst [vmem:[%s309 + $0x80] sm:$0xff] %v342
                  %v344 = vld [vmem:[%s308 + $0x198] sm:$0xff]
                  %345 = vst [vmem:[%s309 + $0x88] sm:$0xff] %v344
                  %v346 = vld [vmem:[%s308 + $0x1b0] sm:$0xff]
                  %347 = vst [vmem:[%s309 + $0x90] sm:$0xff] %v346
                  %v348 = vld [vmem:[%s308 + $0x1c8] sm:$0xff]
                  %349 = vst [vmem:[%s309 + $0x98] sm:$0xff] %v348
                  %v350 = vld [vmem:[%s308 + $0x1e0] sm:$0xff]
                  %351 = vst [vmem:[%s309 + $0xa0] sm:$0xff] %v350
                  %v352 = vld [vmem:[%s308 + $0x1f8] sm:$0xff]
                  %353 = vst [vmem:[%s309 + $0xa8] sm:$0xff] %v352
                  %v354 = vld [vmem:[%s308 + $0x210] sm:$0xff]
                  %355 = vst [vmem:[%s309 + $0xb0] sm:$0xff] %v354
                  %v356 = vld [vmem:[%s308 + $0x228] sm:$0xff]
                  %357 = vst [vmem:[%s309 + $0xb8] sm:$0xff] %v356
                  %v358 = vld [vmem:[%s308 + $0x240] sm:$0xff]
                  %359 = vst [vmem:[%s309 + $0xc0] sm:$0xff] %v358
                  %v360 = vld [vmem:[%s308 + $0x258] sm:$0xff]
                  %361 = vst [vmem:[%s309 + $0xc8] sm:$0xff] %v360
                  %v362 = vld [vmem:[%s308 + $0x270] sm:$0xff]
                  %363 = vst [vmem:[%s309 + $0xd0] sm:$0xff] %v362
                  %v364 = vld [vmem:[%s308 + $0x288] sm:$0xff]
                  %365 = vst [vmem:[%s309 + $0xd8] sm:$0xff] %v364
                  %v366 = vld [vmem:[%s308 + $0x2a0] sm:$0xff]
                  %367 = vst [vmem:[%s309 + $0xe0] sm:$0xff] %v366
                  %v368 = vld [vmem:[%s308 + $0x2b8] sm:$0xff]
                  %369 = vst [vmem:[%s309 + $0xe8] sm:$0xff] %v368
                  %v370 = vld [vmem:[%s308 + $0x2d0] sm:$0xff]
                  %371 = vst [vmem:[%s309 + $0xf0] sm:$0xff] %v370
                  %v372 = vld [vmem:[%s308 + $0x2e8] sm:$0xff]
                  %373 = vst [vmem:[%s309 + $0xf8] sm:$0xff] %v372
                $region71: #{edge_loss.1} parent=65 // loop_footer
                  %s307 = sadd.s32 1, %s303
                $region72: #{edge_loss.1} parent=65 // loop_footer_branch
                  %302 = sbr.rel target = $region68
                $region73: #{edge_loss.1} parent=65 // loop_exit
                  _
              $region66: #{edge_loss.1} parent=50 // pred_fallthru
                _
              // Predicated region
              $region74: #{edge_loss.1} parent=50 // pred_check
                _
              $region75: #{edge_loss.1} parent=50 // pred_check_branch
                %375 = sbr.rel target = $region77
              $region76: #{edge_loss.1} parent=50 // pred_region
                _
              $region77: #{edge_loss.1} parent=50 // pred_fallthru
                _
            $region51: #{edge_loss.1} parent=46 // pred_fallthru
              _
            // Predicated region
            $region52: #{edge_loss.1} parent=46 // pred_check
              _
            $region53: #{edge_loss.1} parent=46 // pred_check_branch
              %226 = sbr.rel target = $region55
            $region54: #{edge_loss.1} parent=46 // pred_region
              loop: start=0, step=1, limit=1
              $region56: #{edge_loss.1} parent=54 // loop_pre_header
                _
              $region57: #{edge_loss.1} parent=54 // loop_header
                %s229 = sphi 0, %s233
                %p230 = scmp.ge.s32.totalorder %s229, 1
                %s234 = sphi %s220, %s220
                %s235 = sphi %s215, %s215
              $region58: #{edge_loss.1} parent=54 // loop_header_branch
                %232 = sbr.rel (%p230) target = $region62
              $region59: #{edge_loss.1} parent=54 // loop_body
                %v236 = vld [vmem:[%s234] sm:$0xff]
                %237 = vst [vmem:[%s235] sm:$0xff] %v236
                %v238 = vld [vmem:[%s234 + $0x18] sm:$0xff]
                %239 = vst [vmem:[%s235 + $0x8] sm:$0xff] %v238
                %v240 = vld [vmem:[%s234 + $0x30] sm:$0xff]
                %241 = vst [vmem:[%s235 + $0x10] sm:$0xff] %v240
                %v242 = vld [vmem:[%s234 + $0x48] sm:$0xff]
                %243 = vst [vmem:[%s235 + $0x18] sm:$0xff] %v242
                %v244 = vld [vmem:[%s234 + $0x60] sm:$0xff]
                %245 = vst [vmem:[%s235 + $0x20] sm:$0xff] %v244
                %v246 = vld [vmem:[%s234 + $0x78] sm:$0xff]
                %247 = vst [vmem:[%s235 + $0x28] sm:$0xff] %v246
                %v248 = vld [vmem:[%s234 + $0x90] sm:$0xff]
                %249 = vst [vmem:[%s235 + $0x30] sm:$0xff] %v248
                %v250 = vld [vmem:[%s234 + $0xa8] sm:$0xff]
                %251 = vst [vmem:[%s235 + $0x38] sm:$0xff] %v250
                %v252 = vld [vmem:[%s234 + $0xc0] sm:$0xff]
                %253 = vst [vmem:[%s235 + $0x40] sm:$0xff] %v252
                %v254 = vld [vmem:[%s234 + $0xd8] sm:$0xff]
                %255 = vst [vmem:[%s235 + $0x48] sm:$0xff] %v254
                %v256 = vld [vmem:[%s234 + $0xf0] sm:$0xff]
                %257 = vst [vmem:[%s235 + $0x50] sm:$0xff] %v256
                %v258 = vld [vmem:[%s234 + $0x108] sm:$0xff]
                %259 = vst [vmem:[%s235 + $0x58] sm:$0xff] %v258
                %v260 = vld [vmem:[%s234 + $0x120] sm:$0xff]
                %261 = vst [vmem:[%s235 + $0x60] sm:$0xff] %v260
                %v262 = vld [vmem:[%s234 + $0x138] sm:$0xff]
                %263 = vst [vmem:[%s235 + $0x68] sm:$0xff] %v262
                %v264 = vld [vmem:[%s234 + $0x150] sm:$0xff]
                %265 = vst [vmem:[%s235 + $0x70] sm:$0xff] %v264
                %v266 = vld [vmem:[%s234 + $0x168] sm:$0xff]
                %267 = vst [vmem:[%s235 + $0x78] sm:$0xff] %v266
                %v268 = vld [vmem:[%s234 + $0x180] sm:$0xff]
                %269 = vst [vmem:[%s235 + $0x80] sm:$0xff] %v268
                %v270 = vld [vmem:[%s234 + $0x198] sm:$0xff]
                %271 = vst [vmem:[%s235 + $0x88] sm:$0xff] %v270
                %v272 = vld [vmem:[%s234 + $0x1b0] sm:$0xff]
                %273 = vst [vmem:[%s235 + $0x90] sm:$0xff] %v272
                %v274 = vld [vmem:[%s234 + $0x1c8] sm:$0xff]
                %275 = vst [vmem:[%s235 + $0x98] sm:$0xff] %v274
                %v276 = vld [vmem:[%s234 + $0x1e0] sm:$0xff]
                %277 = vst [vmem:[%s235 + $0xa0] sm:$0xff] %v276
                %v278 = vld [vmem:[%s234 + $0x1f8] sm:$0xff]
                %279 = vst [vmem:[%s235 + $0xa8] sm:$0xff] %v278
                %v280 = vld [vmem:[%s234 + $0x210] sm:$0xff]
                %281 = vst [vmem:[%s235 + $0xb0] sm:$0xff] %v280
                %v282 = vld [vmem:[%s234 + $0x228] sm:$0xff]
                %283 = vst [vmem:[%s235 + $0xb8] sm:$0xff] %v282
                %v284 = vld [vmem:[%s234 + $0x240] sm:$0xff]
                %285 = vst [vmem:[%s235 + $0xc0] sm:$0xff] %v284
                %v286 = vld [vmem:[%s234 + $0x258] sm:$0xff]
                %287 = vst [vmem:[%s235 + $0xc8] sm:$0xff] %v286
                %v288 = vld [vmem:[%s234 + $0x270] sm:$0xff]
                %289 = vst [vmem:[%s235 + $0xd0] sm:$0xff] %v288
                %v290 = vld [vmem:[%s234 + $0x288] sm:$0xff]
                %291 = vst [vmem:[%s235 + $0xd8] sm:$0xff] %v290
                %v292 = vld [vmem:[%s234 + $0x2a0] sm:$0xff]
                %293 = vst [vmem:[%s235 + $0xe0] sm:$0xff] %v292
                %v294 = vld [vmem:[%s234 + $0x2b8] sm:$0xff]
                %295 = vst [vmem:[%s235 + $0xe8] sm:$0xff] %v294
                %v296 = vld [vmem:[%s234 + $0x2d0] sm:$0xff]
                %297 = vst [vmem:[%s235 + $0xf0] sm:$0xff] %v296
                %v298 = vld [vmem:[%s234 + $0x2e8] sm:$0xff]
                %299 = vst [vmem:[%s235 + $0xf8] sm:$0xff] %v298
              $region60: #{edge_loss.1} parent=54 // loop_footer
                %s233 = sadd.s32 1, %s229
              $region61: #{edge_loss.1} parent=54 // loop_footer_branch
                %228 = sbr.rel target = $region57
              $region62: #{edge_loss.1} parent=54 // loop_exit
                _
            $region55: #{edge_loss.1} parent=46 // pred_fallthru
              _
          $region47: #{edge_loss.1} parent=42 // pred_fallthru
            _
          %376 = vnop
        $region43: #{edge_loss.1} parent=15 // pred_fallthru
          _
      $region16: #{edge_loss.1} parent=5 // pred_fallthru
        _
      %p377 = scmp.le.s32.totalorder 1, %s9
      %p378 = scmp.lt.s32.totalorder %s9, 7
      %p379 = pnand %p377, %p378
      %p380 = pneg %p379
      // Predicated region
      $region78: #{edge_loss.1} parent=5 // pred_check
        _
      $region79: #{edge_loss.1} parent=5 // pred_check_branch
        %382 = sbr.rel (%p379) target = $region81
      $region80: #{edge_loss.1} parent=5 // pred_region
        %s383 = ssub.s32 %s9, 1
        %s384 = sand.u32 %s36, 1
        %s385 = sand.u32 %s36, 1
        %s386 = smul.addr %s385, 256
        %s387 = scalar_lea.vmem [#allocation6], %s386
        // Predicated region
        $region82: #{edge_loss.1} parent=80 // pred_check
          %p388 = pneg %p49
        $region83: #{edge_loss.1} parent=80 // pred_check_branch
          %390 = sbr.rel (%p388) target = $region85
        $region84: #{edge_loss.1} parent=80 // pred_region
          _
        $region85: #{edge_loss.1} parent=80 // pred_fallthru
          _
        %s391 = sand.u32 %s64, 1
        %s392 = sand.u32 %s64, 1
        %s393 = smul.addr %s392, 256
        %s394 = scalar_lea.vmem [#allocation7], %s393
        // Predicated region
        $region86: #{edge_loss.1} parent=80 // pred_check
          %p395 = pneg %p77
        $region87: #{edge_loss.1} parent=80 // pred_check_branch
          %397 = sbr.rel (%p395) target = $region89
        $region88: #{edge_loss.1} parent=80 // pred_region
          _
        $region89: #{edge_loss.1} parent=80 // pred_fallthru
          _
        %s398 = sand.u32 %s36, 1
        %s399 = sand.u32 %s36, 1
        %s400 = smul.addr %s399, 256
        %s401 = scalar_lea.vmem [#allocation6], %s400
        %p402 = pneg %p49
        %p403 = pneg %p46
        %s404 = sand.u32 %s64, 1
        %s405 = sand.u32 %s64, 1
        %s406 = smul.addr %s405, 256
        %s407 = scalar_lea.vmem [#allocation7], %s406
        %p408 = pneg %p77
        %p409 = pneg %p74
        %p410 = pneg %p98
        %p411 = pneg %p95
        %s412 = smul.u32 16, %s18
        %s413 = smul.u32 2, %s19
        %s414 = smul.u32 32, %s19
        %p415 = scmp.eq.s32.totalorder %s18, 0
        %p416 = scmp.eq.s32.totalorder %s19, 0
        %p417 = pnand %p415, %p416
        %p418 = pneg %p417
        // Predicated region
        $region90: #{edge_loss.1} parent=80 // pred_check
          _
        $region91: #{edge_loss.1} parent=80 // pred_check_branch
          %420 = sbr.rel (%p417) target = $region93
        $region92: #{edge_loss.1} parent=80 // pred_region
          %vm421 = vcmask 0
          %422 = vst.msk [vmem:[#allocation2] sm:$0x1] %vm421, 0.0
          %v423 = vlaneseq
          %vm424 = vcmp.ge.s32.totalorder %v423, 0
          %vm425 = vcmp.lt.s32.totalorder %v423, 512
          %vm426 = vmand %vm424, %vm425
          %427 = vst.msk [vmem:[#allocation3] sm:$0xf] %vm426, 0.0
          %428 = vst.msk [vmem:[#allocation4] sm:$0xf] %vm426, 0.0
          %429 = vst.msk [vmem:[#allocation5] sm:$0xf] %vm426, 0.0
        $region93: #{edge_loss.1} parent=80 // pred_fallthru
          _
        %v430 = vld [vmem:[%s387] sm:$0xff]
        %v431 = vld [vmem:[%s387 + $0x8] sm:$0xff]
        %v432 = vld [vmem:[%s387 + $0x10] sm:$0xff]
        %v433 = vld [vmem:[%s387 + $0x18] sm:$0xff]
        %v434 = vld [vmem:[%s387 + $0x20] sm:$0xff]
        %v435 = vld [vmem:[%s387 + $0x28] sm:$0xff]
        %v436 = vld [vmem:[%s387 + $0x30] sm:$0xff]
        %v437 = vld [vmem:[%s387 + $0x38] sm:$0xff]
        %v438 = vld [vmem:[%s387 + $0x40] sm:$0xff]
        %v439 = vld [vmem:[%s387 + $0x48] sm:$0xff]
        %v440 = vld [vmem:[%s387 + $0x50] sm:$0xff]
        %v441 = vld [vmem:[%s387 + $0x58] sm:$0xff]
        %v442 = vld [vmem:[%s387 + $0x60] sm:$0xff]
        %v443 = vld [vmem:[%s387 + $0x68] sm:$0xff]
        %v444 = vld [vmem:[%s387 + $0x70] sm:$0xff]
        %v445 = vld [vmem:[%s387 + $0x78] sm:$0xff]
        %v446 = vld [vmem:[%s387 + $0x80] sm:$0xff]
        %v447 = vld [vmem:[%s387 + $0x88] sm:$0xff]
        %v448 = vld [vmem:[%s387 + $0x90] sm:$0xff]
        %v449 = vld [vmem:[%s387 + $0x98] sm:$0xff]
        %v450 = vld [vmem:[%s387 + $0xa0] sm:$0xff]
        %v451 = vld [vmem:[%s387 + $0xa8] sm:$0xff]
        %v452 = vld [vmem:[%s387 + $0xb0] sm:$0xff]
        %v453 = vld [vmem:[%s387 + $0xb8] sm:$0xff]
        %v454 = vld [vmem:[%s387 + $0xc0] sm:$0xff]
        %v455 = vld [vmem:[%s387 + $0xc8] sm:$0xff]
        %v456 = vld [vmem:[%s387 + $0xd0] sm:$0xff]
        %v457 = vld [vmem:[%s387 + $0xd8] sm:$0xff]
        %v458 = vld [vmem:[%s387 + $0xe0] sm:$0xff]
        %v459 = vld [vmem:[%s387 + $0xe8] sm:$0xff]
        %v460 = vld [vmem:[%s387 + $0xf0] sm:$0xff]
        %v461 = vld [vmem:[%s387 + $0xf8] sm:$0xff]
        %v462 = vld [vmem:[%s394] sm:$0xff]
        %v463 = vld [vmem:[%s394 + $0x8] sm:$0xff]
        %v464 = vld [vmem:[%s394 + $0x10] sm:$0xff]
        %v465 = vld [vmem:[%s394 + $0x18] sm:$0xff]
        %v466 = vld [vmem:[%s394 + $0x20] sm:$0xff]
        %v467 = vld [vmem:[%s394 + $0x28] sm:$0xff]
        %v468 = vld [vmem:[%s394 + $0x30] sm:$0xff]
        %v469 = vld [vmem:[%s394 + $0x38] sm:$0xff]
        %v470 = vld [vmem:[%s394 + $0x40] sm:$0xff]
        %v471 = vld [vmem:[%s394 + $0x48] sm:$0xff]
        %v472 = vld [vmem:[%s394 + $0x50] sm:$0xff]
        %v473 = vld [vmem:[%s394 + $0x58] sm:$0xff]
        %v474 = vld [vmem:[%s394 + $0x60] sm:$0xff]
        %v475 = vld [vmem:[%s394 + $0x68] sm:$0xff]
        %v476 = vld [vmem:[%s394 + $0x70] sm:$0xff]
        %v477 = vld [vmem:[%s394 + $0x78] sm:$0xff]
        %v478 = vld [vmem:[%s394 + $0x80] sm:$0xff]
        %v479 = vld [vmem:[%s394 + $0x88] sm:$0xff]
        %v480 = vld [vmem:[%s394 + $0x90] sm:$0xff]
        %v481 = vld [vmem:[%s394 + $0x98] sm:$0xff]
        %v482 = vld [vmem:[%s394 + $0xa0] sm:$0xff]
        %v483 = vld [vmem:[%s394 + $0xa8] sm:$0xff]
        %v484 = vld [vmem:[%s394 + $0xb0] sm:$0xff]
        %v485 = vld [vmem:[%s394 + $0xb8] sm:$0xff]
        %v486 = vld [vmem:[%s394 + $0xc0] sm:$0xff]
        %v487 = vld [vmem:[%s394 + $0xc8] sm:$0xff]
        %v488 = vld [vmem:[%s394 + $0xd0] sm:$0xff]
        %v489 = vld [vmem:[%s394 + $0xd8] sm:$0xff]
        %v490 = vld [vmem:[%s394 + $0xe0] sm:$0xff]
        %v491 = vld [vmem:[%s394 + $0xe8] sm:$0xff]
        %v492 = vld [vmem:[%s394 + $0xf0] sm:$0xff]
        %v493 = vld [vmem:[%s394 + $0xf8] sm:$0xff]
        %494 = vxpose.xlu0.b32.start [1/16] %v430, 128
        %495 = vxpose.xlu0.b32.cont [2/16] %v432, 128
        %496 = vxpose.xlu0.b32.cont [3/16] %v434, 128
        %497 = vxpose.xlu0.b32.cont [4/16] %v436, 128
        %498 = vxpose.xlu0.b32.cont [5/16] %v438, 128
        %499 = vxpose.xlu0.b32.cont [6/16] %v440, 128
        %500 = vxpose.xlu0.b32.cont [7/16] %v442, 128
        %501 = vxpose.xlu0.b32.cont [8/16] %v444, 128
        %502 = vxpose.xlu0.b32.cont [9/16] %v446, 128
        %503 = vxpose.xlu0.b32.cont [10/16] %v448, 128
        %504 = vxpose.xlu0.b32.cont [11/16] %v450, 128
        %505 = vxpose.xlu0.b32.cont [12/16] %v452, 128
        %506 = vxpose.xlu0.b32.cont [13/16] %v454, 128
        %507 = vxpose.xlu0.b32.cont [14/16] %v456, 128
        %508 = vxpose.xlu0.b32.cont [15/16] %v458, 128
        %509 = vxpose.xlu0.b32.end [16/16] %v460, 128
        %v510 = vpop.trf.xlu0
        %v511 = vpop.trf.xlu0
        %v512 = vpop.trf.xlu0
        %v513 = vpop.trf.xlu0
        %v514 = vpop.trf.xlu0
        %v515 = vpop.trf.xlu0
        %v516 = vpop.trf.xlu0
        %v517 = vpop.trf.xlu0
        %v518 = vpop.trf.xlu0
        %v519 = vpop.trf.xlu0
        %v520 = vpop.trf.xlu0
        %v521 = vpop.trf.xlu0
        %v522 = vpop.trf.xlu0
        %v523 = vpop.trf.xlu0
        %v524 = vpop.trf.xlu0
        %v525 = vpop.trf.xlu0
        %526 = vxpose.xlu0.b32.start [1/16] %v431, 128
        %527 = vxpose.xlu0.b32.cont [2/16] %v433, 128
        %528 = vxpose.xlu0.b32.cont [3/16] %v435, 128
        %529 = vxpose.xlu0.b32.cont [4/16] %v437, 128
        %530 = vxpose.xlu0.b32.cont [5/16] %v439, 128
        %531 = vxpose.xlu0.b32.cont [6/16] %v441, 128
        %532 = vxpose.xlu0.b32.cont [7/16] %v443, 128
        %533 = vxpose.xlu0.b32.cont [8/16] %v445, 128
        %534 = vxpose.xlu0.b32.cont [9/16] %v447, 128
        %535 = vxpose.xlu0.b32.cont [10/16] %v449, 128
        %536 = vxpose.xlu0.b32.cont [11/16] %v451, 128
        %537 = vxpose.xlu0.b32.cont [12/16] %v453, 128
        %538 = vxpose.xlu0.b32.cont [13/16] %v455, 128
        %539 = vxpose.xlu0.b32.cont [14/16] %v457, 128
        %540 = vxpose.xlu0.b32.cont [15/16] %v459, 128
        %541 = vxpose.xlu0.b32.end [16/16] %v461, 128
        %v542 = vpop.trf.xlu0
        %v543 = vpop.trf.xlu0
        %v544 = vpop.trf.xlu0
        %v545 = vpop.trf.xlu0
        %v546 = vpop.trf.xlu0
        %v547 = vpop.trf.xlu0
        %v548 = vpop.trf.xlu0
        %v549 = vpop.trf.xlu0
        %v550 = vpop.trf.xlu0
        %v551 = vpop.trf.xlu0
        %v552 = vpop.trf.xlu0
        %v553 = vpop.trf.xlu0
        %v554 = vpop.trf.xlu0
        %v555 = vpop.trf.xlu0
        %v556 = vpop.trf.xlu0
        %v557 = vpop.trf.xlu0
        %vm558 = vcmp.ne.f32.partialorder %v430, 0.0
        %vm559 = vcmp.ne.f32.partialorder %v431, 0.0
        %vm560 = vcmp.ne.f32.partialorder %v432, 0.0
        %vm561 = vcmp.ne.f32.partialorder %v433, 0.0
        %vm562 = vcmp.ne.f32.partialorder %v434, 0.0
        %vm563 = vcmp.ne.f32.partialorder %v435, 0.0
        %vm564 = vcmp.ne.f32.partialorder %v436, 0.0
        %vm565 = vcmp.ne.f32.partialorder %v437, 0.0
        %vm566 = vcmp.ne.f32.partialorder %v438, 0.0
        %vm567 = vcmp.ne.f32.partialorder %v439, 0.0
        %vm568 = vcmp.ne.f32.partialorder %v440, 0.0
        %vm569 = vcmp.ne.f32.partialorder %v441, 0.0
        %vm570 = vcmp.ne.f32.partialorder %v442, 0.0
        %vm571 = vcmp.ne.f32.partialorder %v443, 0.0
        %vm572 = vcmp.ne.f32.partialorder %v444, 0.0
        %vm573 = vcmp.ne.f32.partialorder %v445, 0.0
        %vm574 = vcmp.ne.f32.partialorder %v446, 0.0
        %vm575 = vcmp.ne.f32.partialorder %v447, 0.0
        %vm576 = vcmp.ne.f32.partialorder %v448, 0.0
        %vm577 = vcmp.ne.f32.partialorder %v449, 0.0
        %vm578 = vcmp.ne.f32.partialorder %v450, 0.0
        %vm579 = vcmp.ne.f32.partialorder %v451, 0.0
        %vm580 = vcmp.ne.f32.partialorder %v452, 0.0
        %vm581 = vcmp.ne.f32.partialorder %v453, 0.0
        %vm582 = vcmp.ne.f32.partialorder %v454, 0.0
        %vm583 = vcmp.ne.f32.partialorder %v455, 0.0
        %vm584 = vcmp.ne.f32.partialorder %v456, 0.0
        %vm585 = vcmp.ne.f32.partialorder %v457, 0.0
        %vm586 = vcmp.ne.f32.partialorder %v458, 0.0
        %vm587 = vcmp.ne.f32.partialorder %v459, 0.0
        %vm588 = vcmp.ne.f32.partialorder %v460, 0.0
        %vm589 = vcmp.ne.f32.partialorder %v461, 0.0
        %v590 = vsel %vm558, 1, 0
        %v591 = vsel %vm559, 1, 0
        %v592 = vsel %vm560, 1, 0
        %v593 = vsel %vm561, 1, 0
        %v594 = vsel %vm562, 1, 0
        %v595 = vsel %vm563, 1, 0
        %v596 = vsel %vm564, 1, 0
        %v597 = vsel %vm565, 1, 0
        %v598 = vsel %vm566, 1, 0
        %v599 = vsel %vm567, 1, 0
        %v600 = vsel %vm568, 1, 0
        %v601 = vsel %vm569, 1, 0
        %v602 = vsel %vm570, 1, 0
        %v603 = vsel %vm571, 1, 0
        %v604 = vsel %vm572, 1, 0
        %v605 = vsel %vm573, 1, 0
        %v606 = vsel %vm574, 1, 0
        %v607 = vsel %vm575, 1, 0
        %v608 = vsel %vm576, 1, 0
        %v609 = vsel %vm577, 1, 0
        %v610 = vsel %vm578, 1, 0
        %v611 = vsel %vm579, 1, 0
        %v612 = vsel %vm580, 1, 0
        %v613 = vsel %vm581, 1, 0
        %v614 = vsel %vm582, 1, 0
        %v615 = vsel %vm583, 1, 0
        %v616 = vsel %vm584, 1, 0
        %v617 = vsel %vm585, 1, 0
        %v618 = vsel %vm586, 1, 0
        %v619 = vsel %vm587, 1, 0
        %v620 = vsel %vm588, 1, 0
        %v621 = vsel %vm589, 1, 0
        %v622 = vcvt.s32.f32 %v590
        %v623 = vcvt.s32.f32 %v591
        %v624 = vcvt.s32.f32 %v592
        %v625 = vcvt.s32.f32 %v593
        %v626 = vcvt.s32.f32 %v594
        %v627 = vcvt.s32.f32 %v595
        %v628 = vcvt.s32.f32 %v596
        %v629 = vcvt.s32.f32 %v597
        %v630 = vcvt.s32.f32 %v598
        %v631 = vcvt.s32.f32 %v599
        %v632 = vcvt.s32.f32 %v600
        %v633 = vcvt.s32.f32 %v601
        %v634 = vcvt.s32.f32 %v602
        %v635 = vcvt.s32.f32 %v603
        %v636 = vcvt.s32.f32 %v604
        %v637 = vcvt.s32.f32 %v605
        %v638 = vcvt.s32.f32 %v606
        %v639 = vcvt.s32.f32 %v607
        %v640 = vcvt.s32.f32 %v608
        %v641 = vcvt.s32.f32 %v609
        %v642 = vcvt.s32.f32 %v610
        %v643 = vcvt.s32.f32 %v611
        %v644 = vcvt.s32.f32 %v612
        %v645 = vcvt.s32.f32 %v613
        %v646 = vcvt.s32.f32 %v614
        %v647 = vcvt.s32.f32 %v615
        %v648 = vcvt.s32.f32 %v616
        %v649 = vcvt.s32.f32 %v617
        %v650 = vcvt.s32.f32 %v618
        %v651 = vcvt.s32.f32 %v619
        %v652 = vcvt.s32.f32 %v620
        %v653 = vcvt.s32.f32 %v621
        %vm654 = vcmp.ne.f32.partialorder %v510, 0.0
        %vm655 = vcmp.ne.f32.partialorder %v511, 0.0
        %vm656 = vcmp.ne.f32.partialorder %v512, 0.0
        %vm657 = vcmp.ne.f32.partialorder %v513, 0.0
        %vm658 = vcmp.ne.f32.partialorder %v514, 0.0
        %vm659 = vcmp.ne.f32.partialorder %v515, 0.0
        %vm660 = vcmp.ne.f32.partialorder %v516, 0.0
        %vm661 = vcmp.ne.f32.partialorder %v517, 0.0
        %vm662 = vcmp.ne.f32.partialorder %v518, 0.0
        %vm663 = vcmp.ne.f32.partialorder %v519, 0.0
        %vm664 = vcmp.ne.f32.partialorder %v520, 0.0
        %vm665 = vcmp.ne.f32.partialorder %v521, 0.0
        %vm666 = vcmp.ne.f32.partialorder %v522, 0.0
        %vm667 = vcmp.ne.f32.partialorder %v523, 0.0
        %vm668 = vcmp.ne.f32.partialorder %v524, 0.0
        %vm669 = vcmp.ne.f32.partialorder %v525, 0.0
        %vm670 = vcmp.ne.f32.partialorder %v542, 0.0
        %vm671 = vcmp.ne.f32.partialorder %v543, 0.0
        %vm672 = vcmp.ne.f32.partialorder %v544, 0.0
        %vm673 = vcmp.ne.f32.partialorder %v545, 0.0
        %vm674 = vcmp.ne.f32.partialorder %v546, 0.0
        %vm675 = vcmp.ne.f32.partialorder %v547, 0.0
        %vm676 = vcmp.ne.f32.partialorder %v548, 0.0
        %vm677 = vcmp.ne.f32.partialorder %v549, 0.0
        %vm678 = vcmp.ne.f32.partialorder %v550, 0.0
        %vm679 = vcmp.ne.f32.partialorder %v551, 0.0
        %vm680 = vcmp.ne.f32.partialorder %v552, 0.0
        %vm681 = vcmp.ne.f32.partialorder %v553, 0.0
        %vm682 = vcmp.ne.f32.partialorder %v554, 0.0
        %vm683 = vcmp.ne.f32.partialorder %v555, 0.0
        %vm684 = vcmp.ne.f32.partialorder %v556, 0.0
        %vm685 = vcmp.ne.f32.partialorder %v557, 0.0
        %v686 = vsel %vm654, 1, 0
        %v687 = vsel %vm655, 1, 0
        %v688 = vsel %vm656, 1, 0
        %v689 = vsel %vm657, 1, 0
        %v690 = vsel %vm658, 1, 0
        %v691 = vsel %vm659, 1, 0
        %v692 = vsel %vm660, 1, 0
        %v693 = vsel %vm661, 1, 0
        %v694 = vsel %vm662, 1, 0
        %v695 = vsel %vm663, 1, 0
        %v696 = vsel %vm664, 1, 0
        %v697 = vsel %vm665, 1, 0
        %v698 = vsel %vm666, 1, 0
        %v699 = vsel %vm667, 1, 0
        %v700 = vsel %vm668, 1, 0
        %v701 = vsel %vm669, 1, 0
        %v702 = vsel %vm670, 1, 0
        %v703 = vsel %vm671, 1, 0
        %v704 = vsel %vm672, 1, 0
        %v705 = vsel %vm673, 1, 0
        %v706 = vsel %vm674, 1, 0
        %v707 = vsel %vm675, 1, 0
        %v708 = vsel %vm676, 1, 0
        %v709 = vsel %vm677, 1, 0
        %v710 = vsel %vm678, 1, 0
        %v711 = vsel %vm679, 1, 0
        %v712 = vsel %vm680, 1, 0
        %v713 = vsel %vm681, 1, 0
        %v714 = vsel %vm682, 1, 0
        %v715 = vsel %vm683, 1, 0
        %v716 = vsel %vm684, 1, 0
        %v717 = vsel %vm685, 1, 0
        %v718 = vcvt.s32.f32 %v686
        %v719 = vcvt.s32.f32 %v687
        %v720 = vcvt.s32.f32 %v688
        %v721 = vcvt.s32.f32 %v689
        %v722 = vcvt.s32.f32 %v690
        %v723 = vcvt.s32.f32 %v691
        %v724 = vcvt.s32.f32 %v692
        %v725 = vcvt.s32.f32 %v693
        %v726 = vcvt.s32.f32 %v694
        %v727 = vcvt.s32.f32 %v695
        %v728 = vcvt.s32.f32 %v696
        %v729 = vcvt.s32.f32 %v697
        %v730 = vcvt.s32.f32 %v698
        %v731 = vcvt.s32.f32 %v699
        %v732 = vcvt.s32.f32 %v700
        %v733 = vcvt.s32.f32 %v701
        %v734 = vcvt.s32.f32 %v702
        %v735 = vcvt.s32.f32 %v703
        %v736 = vcvt.s32.f32 %v704
        %v737 = vcvt.s32.f32 %v705
        %v738 = vcvt.s32.f32 %v706
        %v739 = vcvt.s32.f32 %v707
        %v740 = vcvt.s32.f32 %v708
        %v741 = vcvt.s32.f32 %v709
        %v742 = vcvt.s32.f32 %v710
        %v743 = vcvt.s32.f32 %v711
        %v744 = vcvt.s32.f32 %v712
        %v745 = vcvt.s32.f32 %v713
        %v746 = vcvt.s32.f32 %v714
        %v747 = vcvt.s32.f32 %v715
        %v748 = vcvt.s32.f32 %v716
        %v749 = vcvt.s32.f32 %v717
        %v750 = vld [vmem:[#allocation2] sm:$0x1]
        %v751 = vadd.f32 %v622, %v623
        %v752 = vadd.f32 %v751, %v624
        %v753 = vadd.f32 %v752, %v625
        %v754 = vadd.f32 %v753, %v626
        %v755 = vadd.f32 %v754, %v627
        %v756 = vadd.f32 %v755, %v628
        %v757 = vadd.f32 %v756, %v629
        %v758 = vadd.f32 %v757, %v630
        %v759 = vadd.f32 %v758, %v631
        %v760 = vadd.f32 %v759, %v632
        %v761 = vadd.f32 %v760, %v633
        %v762 = vadd.f32 %v761, %v634
        %v763 = vadd.f32 %v762, %v635
        %v764 = vadd.f32 %v763, %v636
        %v765 = vadd.f32 %v764, %v637
        %v766 = vadd.f32 %v765, %v638
        %v767 = vadd.f32 %v766, %v639
        %v768 = vadd.f32 %v767, %v640
        %v769 = vadd.f32 %v768, %v641
        %v770 = vadd.f32 %v769, %v642
        %v771 = vadd.f32 %v770, %v643
        %v772 = vadd.f32 %v771, %v644
        %v773 = vadd.f32 %v772, %v645
        %v774 = vadd.f32 %v773, %v646
        %v775 = vadd.f32 %v774, %v647
        %v776 = vadd.f32 %v775, %v648
        %v777 = vadd.f32 %v776, %v649
        %v778 = vadd.f32 %v777, %v650
        %v779 = vadd.f32 %v778, %v651
        %v780 = vadd.f32 %v779, %v652
        %v781 = vadd.f32 %v780, %v653
        %782 = vadd.xlane.f32.xlu0 %v781
        %v783 = vpop.xlane.xlu0 %782
        %v784 = vrot.slane %v783, 4
        %v785 = vadd.f32 %v783, %v784
        %v786 = vrot.slane %v785, 2
        %v787 = vadd.f32 %v785, %v786
        %v788 = vrot.slane %v787, 1
        %v789 = vadd.f32 %v787, %v788
        %s790 = vtos %v789
        %v791 = vstv %s790
        %v792 = vadd.f32 %v750, %v791
        %vm793 = vcmask 0
        %794 = vst.msk [vmem:[#allocation2] sm:$0x1] %vm793, %v792
        %s795 = smul.u32 %s18, 128
        %s796 = smul.u32 %s19, 256
        %s797 = sshra.s32 %s796, 7
        %s798 = sand.u32 %s796, 127
        %s799 = scalar_lea.vmem [#allocation4], %s797
        %v800 = vld [vmem:[%s799] sm:$0x3]
        %v801 = vmax.f32 %v622, %v626
        %v802 = vmax.f32 %v624, %v628
        %v803 = vmax.f32 %v801, %v630
        %v804 = vmax.f32 %v802, %v632
        %v805 = vmax.f32 %v803, %v634
        %v806 = vmax.f32 %v804, %v636
        %v807 = vmax.f32 %v805, %v638
        %v808 = vmax.f32 %v806, %v640
        %v809 = vmax.f32 %v807, %v642
        %v810 = vmax.f32 %v808, %v644
        %v811 = vmax.f32 %v809, %v646
        %v812 = vmax.f32 %v810, %v648
        %v813 = vmax.f32 %v811, %v650
        %v814 = vmax.f32 %v812, %v652
        %v815 = vmax.f32 %v813, %v814
        %v816 = vrot.slane %v815, 4
        %v817 = vmax.f32 %v815, %v816
        %v818 = vrot.slane %v817, 2
        %v819 = vmax.f32 %v817, %v818
        %v820 = vrot.slane %v819, 1
        %v821 = vmax.f32 %v819, %v820
        %v822 = vmax.f32 %v623, %v627
        %v823 = vmax.f32 %v625, %v629
        %v824 = vmax.f32 %v822, %v631
        %v825 = vmax.f32 %v823, %v633
        %v826 = vmax.f32 %v824, %v635
        %v827 = vmax.f32 %v825, %v637
        %v828 = vmax.f32 %v826, %v639
        %v829 = vmax.f32 %v827, %v641
        %v830 = vmax.f32 %v828, %v643
        %v831 = vmax.f32 %v829, %v645
        %v832 = vmax.f32 %v830, %v647
        %v833 = vmax.f32 %v831, %v649
        %v834 = vmax.f32 %v832, %v651
        %v835 = vmax.f32 %v833, %v653
        %v836 = vmax.f32 %v834, %v835
        %v837 = vrot.slane %v836, 4
        %v838 = vmax.f32 %v836, %v837
        %v839 = vrot.slane %v838, 2
        %v840 = vmax.f32 %v838, %v839
        %v841 = vrot.slane %v840, 1
        %v842 = vmax.f32 %v840, %v841
        %v845 = vcombine.low %v821, %v842
        %v847 = vunpack.c.l.s4 1966171168
        %v848 = vunpack.c.0.s8 %v847
        %v849 = vlaneseq
        %v850 = vshrl.u32 %v849, 7
        %v851 = vsub.s32 %v848, %v850
        %v852 = vrot.slane %v845, %v851
        %v854 = vunpack.c.l.s4 1966171168
        %v855 = vunpack.c.0.s8 %v854
        %v856 = vlaneseq
        %v857 = vshrl.u32 %v856, 7
        %v858 = vsub.s32 %v855, %v857
        %v859 = vrot.slane %v852, %v858
        %v861 = vmax.f32 %v800, %v859
        %v862 = vlaneseq
        %vm863 = vcmp.ge.s32.totalorder %v862, 0
        %vm864 = vcmp.lt.s32.totalorder %v862, 256
        %vm865 = vmand %vm863, %vm864
        %866 = vst.msk [vmem:[%s799] sm:$0x3] %vm865, %v861
        %s867 = sshra.s32 %s795, 7
        %s868 = sand.u32 %s795, 127
        %s869 = scalar_lea.vmem [#allocation3], %s867
        %v870 = vld [vmem:[%s869] sm:$0x1]
        %v871 = vmax.f32 %v718, %v722
        %v872 = vmax.f32 %v719, %v723
        %v873 = vmax.f32 %v720, %v724
        %v874 = vmax.f32 %v721, %v725
        %v875 = vmax.f32 %v871, %v726
        %v876 = vmax.f32 %v872, %v727
        %v877 = vmax.f32 %v873, %v728
        %v878 = vmax.f32 %v874, %v729
        %v879 = vmax.f32 %v875, %v730
        %v880 = vmax.f32 %v876, %v731
        %v881 = vmax.f32 %v877, %v732
        %v882 = vmax.f32 %v878, %v733
        %v883 = vmax.f32 %v879, %v734
        %v884 = vmax.f32 %v880, %v735
        %v885 = vmax.f32 %v881, %v736
        %v886 = vmax.f32 %v882, %v737
        %v887 = vmax.f32 %v883, %v738
        %v888 = vmax.f32 %v884, %v739
        %v889 = vmax.f32 %v885, %v740
        %v890 = vmax.f32 %v886, %v741
        %v891 = vmax.f32 %v887, %v742
        %v892 = vmax.f32 %v888, %v743
        %v893 = vmax.f32 %v889, %v744
        %v894 = vmax.f32 %v890, %v745
        %v895 = vmax.f32 %v891, %v746
        %v896 = vmax.f32 %v892, %v747
        %v897 = vmax.f32 %v893, %v748
        %v898 = vmax.f32 %v894, %v749
        %v899 = vmax.f32 %v895, %v896
        %v900 = vmax.f32 %v897, %v898
        %v901 = vmax.f32 %v899, %v900
        %v902 = vrot.slane %v901, 4
        %v903 = vmax.f32 %v901, %v902
        %v904 = vrot.slane %v903, 2
        %v905 = vmax.f32 %v903, %v904
        %v906 = vrot.slane %v905, 1
        %v907 = vmax.f32 %v905, %v906
        %v908 = vmax.f32 %v870, %v907
        %vm909 = vcmp.lt.s32.totalorder %v862, 128
        %vm910 = vmand %vm863, %vm909
        %911 = vst.msk [vmem:[%s869] sm:$0x1] %vm910, %v908
        %v912 = vsub.f32 %v462, %v510
        %v913 = vsub.f32 %v463, %v511
        %v914 = vsub.f32 %v464, %v512
        %v915 = vsub.f32 %v465, %v513
        %v916 = vsub.f32 %v466, %v514
        %v917 = vsub.f32 %v467, %v515
        %v918 = vsub.f32 %v468, %v516
        %v919 = vsub.f32 %v469, %v517
        %v920 = vsub.f32 %v470, %v518
        %v921 = vsub.f32 %v471, %v519
        %v922 = vsub.f32 %v472, %v520
        %v923 = vsub.f32 %v473, %v521
        %v924 = vsub.f32 %v474, %v522
        %v925 = vsub.f32 %v475, %v523
        %v926 = vsub.f32 %v476, %v524
        %v927 = vsub.f32 %v477, %v525
        %v928 = vsub.f32 %v478, %v542
        %v929 = vsub.f32 %v479, %v543
        %v930 = vsub.f32 %v480, %v544
        %v931 = vsub.f32 %v481, %v545
        %v932 = vsub.f32 %v482, %v546
        %v933 = vsub.f32 %v483, %v547
        %v934 = vsub.f32 %v484, %v548
        %v935 = vsub.f32 %v485, %v549
        %v936 = vsub.f32 %v486, %v550
        %v937 = vsub.f32 %v487, %v551
        %v938 = vsub.f32 %v488, %v552
        %v939 = vsub.f32 %v489, %v553
        %v940 = vsub.f32 %v490, %v554
        %v941 = vsub.f32 %v491, %v555
        %v942 = vsub.f32 %v492, %v556
        %v943 = vsub.f32 %v493, %v557
        %s944 = scalar_lea.vmem [#allocation5], %s867
        %v945 = vld [vmem:[%s944] sm:$0x1]
        %v946 = vmul.f32 %v912, %v912
        %v947 = vmul.f32 %v913, %v913
        %v948 = vmul.f32 %v914, %v914
        %v949 = vmul.f32 %v915, %v915
        %v950 = vmul.f32 %v916, %v916
        %v951 = vmul.f32 %v917, %v917
        %v952 = vmul.f32 %v918, %v918
        %v953 = vmul.f32 %v919, %v919
        %v954 = vmul.f32 %v920, %v920
        %v955 = vmul.f32 %v921, %v921
        %v956 = vmul.f32 %v922, %v922
        %v957 = vmul.f32 %v923, %v923
        %v958 = vmul.f32 %v924, %v924
        %v959 = vmul.f32 %v925, %v925
        %v960 = vmul.f32 %v926, %v926
        %v961 = vmul.f32 %v927, %v927
        %v962 = vmul.f32 %v928, %v928
        %v963 = vmul.f32 %v929, %v929
        %v964 = vmul.f32 %v930, %v930
        %v965 = vmul.f32 %v931, %v931
        %v966 = vmul.f32 %v932, %v932
        %v967 = vmul.f32 %v933, %v933
        %v968 = vmul.f32 %v934, %v934
        %v969 = vmul.f32 %v935, %v935
        %v970 = vmul.f32 %v936, %v936
        %v971 = vmul.f32 %v937, %v937
        %v972 = vmul.f32 %v938, %v938
        %v973 = vmul.f32 %v939, %v939
        %v974 = vmul.f32 %v940, %v940
        %v975 = vmul.f32 %v941, %v941
        %v976 = vmul.f32 %v942, %v942
        %v977 = vmul.f32 %v943, %v943
        %v978 = vadd.f32 %v946, %v947
        %v979 = vadd.f32 %v978, %v948
        %v980 = vadd.f32 %v979, %v949
        %v981 = vadd.f32 %v980, %v950
        %v982 = vadd.f32 %v981, %v951
        %v983 = vadd.f32 %v982, %v952
        %v984 = vadd.f32 %v983, %v953
        %v985 = vadd.f32 %v984, %v954
        %v986 = vadd.f32 %v985, %v955
        %v987 = vadd.f32 %v986, %v956
        %v988 = vadd.f32 %v987, %v957
        %v989 = vadd.f32 %v988, %v958
        %v990 = vadd.f32 %v989, %v959
        %v991 = vadd.f32 %v990, %v960
        %v992 = vadd.f32 %v991, %v961
        %v993 = vadd.f32 %v992, %v962
        %v994 = vadd.f32 %v993, %v963
        %v995 = vadd.f32 %v994, %v964
        %v996 = vadd.f32 %v995, %v965
        %v997 = vadd.f32 %v996, %v966
        %v998 = vadd.f32 %v997, %v967
        %v999 = vadd.f32 %v998, %v968
        %v1000 = vadd.f32 %v999, %v969
        %v1001 = vadd.f32 %v1000, %v970
        %v1002 = vadd.f32 %v1001, %v971
        %v1003 = vadd.f32 %v1002, %v972
        %v1004 = vadd.f32 %v1003, %v973
        %v1005 = vadd.f32 %v1004, %v974
        %v1006 = vadd.f32 %v1005, %v975
        %v1007 = vadd.f32 %v1006, %v976
        %v1008 = vadd.f32 %v1007, %v977
        %v1009 = vrot.slane %v1008, 4
        %v1010 = vadd.f32 %v1008, %v1009
        %v1011 = vrot.slane %v1010, 2
        %v1012 = vadd.f32 %v1010, %v1011
        %v1013 = vrot.slane %v1012, 1
        %v1014 = vadd.f32 %v1012, %v1013
        %v1015 = vadd.f32 %v945, %v1014
        %1016 = vst.msk [vmem:[%s944] sm:$0x1] %vm910, %v1015
        %p1017 = scmp.eq.s32.totalorder %s18, 2
        %p1018 = scmp.eq.s32.totalorder %s19, 1
        %p1019 = pnand %p1017, %p1018
        %p1020 = pneg %p1019
        // Predicated region
        $region94: #{edge_loss.1} parent=80 // pred_check
          _
        $region95: #{edge_loss.1} parent=80 // pred_check_branch
          %1022 = sbr.rel (%p1019) target = $region97
        $region96: #{edge_loss.1} parent=80 // pred_region
          %v1023 = vld [vmem:[#allocation2] sm:$0x1]
          %v1024 = vsub.f32 90000.0, %v1023
          %v1025 = vmax.f32 %v1024, 1.0
          %v1026 = vrcp.pop %v1025
          %v1027 = vmul.f32 %v1023, %v1026
          %v1028 = vld [vmem:[#allocation3] sm:$0xf]
          %v1029 = vld [vmem:[#allocation4] sm:$0xf]
          %v1030 = vmax.f32 %v1028, %v1029
          %vm1031 = vcmp.gt.f32.partialorder %v1030, 0.0
          %1033 = vset.pattern.permute.xlu0 0
          %1034 = vperm.xlu0 %1033, %v1027
          %v1035 = vpop.permute.xlu0 %1034
          %v1037 = vlaneseq
          %v1038 = vshrl.u32 %v1037, 7
          %v1039 = vsub.s32 0, %v1038
          %v1040 = vrot.slane %v1035, %v1039
          %v1041 = vsel %vm1031, 1.0, %v1040
          %v1042 = vld [vmem:[#allocation5] sm:$0xf]
          %v1043 = vmul.f32 %v1041, %v1042
          %v1045 = vlaneseq
          %v1046 = vshrl.u32 %v1045, 7
          %v1047 = vsub.s32 0, %v1046
          %v1048 = vrot.slane %v1043, %v1047
          %v1049 = vlaneseq
          %v1050 = vshrl.u32 %v1049, 7
          %v1051 = vsub.s32 1, %v1050
          %v1052 = vrot.slane %v1043, %v1051
          %v1053 = vlaneseq
          %v1054 = vshrl.u32 %v1053, 7
          %v1055 = vsub.s32 2, %v1054
          %v1056 = vrot.slane %v1043, %v1055
          %v1057 = vlaneseq
          %v1058 = vshrl.u32 %v1057, 7
          %v1059 = vsub.s32 3, %v1058
          %v1060 = vrot.slane %v1043, %v1059
          %vm1065 = vcmask 1040384
          %v1066 = vsel %vm1065, %v1048, 0.0
          %v1067 = vsel %vm1065, %v1052, 0.0
          %v1068 = vadd.f32 %v1066, %v1067
          %v1069 = vsel %vm1065, %v1056, 0.0
          %v1070 = vadd.f32 %v1068, %v1069
          %v1071 = vsel %vm1065, %v1060, 0.0
          %v1072 = vadd.f32 %v1070, %v1071
          %1073 = vadd.xlane.f32.xlu0 %v1072
          %v1074 = vpop.xlane.xlu0 %1073
          %v1075 = vrot.slane %v1074, 4
          %v1076 = vadd.f32 %v1074, %v1075
          %v1077 = vrot.slane %v1076, 2
          %v1078 = vadd.f32 %v1076, %v1077
          %v1079 = vrot.slane %v1078, 1
          %v1080 = vadd.f32 %v1078, %v1079
          %s1081 = vtos %v1080
          %v1082 = vstv %s1081
          %1083 = vst.msk [vmem:[#allocation8] sm:$0x1] %vm793, %v1082
        $region97: #{edge_loss.1} parent=80 // pred_fallthru
          _
        // Predicated region
        $region98: #{edge_loss.1} parent=80 // pred_check
          %p1084 = pneg %p95
        $region99: #{edge_loss.1} parent=80 // pred_check_branch
          %1086 = sbr.rel (%p1084) target = $region101
        $region100: #{edge_loss.1} parent=80 // pred_region
          %s1088 = ssub.s32 16, 16
          %1089 = vsyncadd [#allocation9], %s1088
          %s1091 = sshll.u32 [#allocation8], 4
          %s1092 = int_to_ptr.vmem [resolvable:$true] %s1091
          %1094 = dma.vmem_to_hbm [thread:$0]  %s1092, 16, %s2, [#allocation9]
        $region101: #{edge_loss.1} parent=80 // pred_fallthru
          _
        // Predicated region
        $region102: #{edge_loss.1} parent=80 // pred_check
          %p1095 = pneg %p95
        $region103: #{edge_loss.1} parent=80 // pred_check_branch
          %1097 = sbr.rel (%p1095) target = $region105
        $region104: #{edge_loss.1} parent=80 // pred_region
          %1098 = dma.done [#allocation9], 16
        $region105: #{edge_loss.1} parent=80 // pred_fallthru
          _
      $region81: #{edge_loss.1} parent=5 // pred_fallthru
        _
      %p1099 = scmp.le.s32.totalorder 2, %s9
      // Predicated region
      $region106: #{edge_loss.1} parent=5 // pred_check
        %p1100 = pneg %p1099
      $region107: #{edge_loss.1} parent=5 // pred_check_branch
        %1102 = sbr.rel (%p1100) target = $region109
      $region108: #{edge_loss.1} parent=5 // pred_region
        %s1103 = ssub.s32 %s9, 2
      $region109: #{edge_loss.1} parent=5 // pred_fallthru
        _
    $region6: #{edge_loss.1} parent=1 // loop_footer
      %s13 = sadd.s32 1, %s9
    $region7: #{edge_loss.1} parent=1 // loop_footer_branch
      %8 = sbr.rel target = $region3
    $region8: #{edge_loss.1} parent=1 // loop_exit
      _
    %1104 = vsyncpa [#allocation9], 1
    %s1105 = scalar_lea.sflag [#allocation9], 1
    %1106 = vsyncpa %s1105, 1

</llo_original>
